<compile_context>
chip_gen: v5e
topology: v5e:2x2
jax: 0.10.0
libtpu: 0.0.40
codegen_flags: <defaults>
</compile_context>

<pallas_src>
import jax
import jax.numpy as jnp
from jax.experimental import pallas as pl
from jax.experimental.pallas import tpu as pltpu


def mlp_softmax_kernel(x_ref, w0_ref, b0_ref, w1_ref, b1_ref, w2_ref, b2_ref, o_ref):
    """One batch tile of the whole-network forward (all operands in VMEM)."""
    x = x_ref[...]  # (TB, 1)

    # layer0: Linear(1 -> H) + ReLU. K=1 contraction -> plain VPU broadcast FMA.
    h = x * w0_ref[...] + b0_ref[...]            # (TB,1)*(1,H) -> (TB,H)
    h = jnp.maximum(h, 0.0)

    # layer1: Linear(H -> H) + ReLU (MXU)
    h = jnp.dot(h, w1_ref[...], preferred_element_type=jnp.float32) + b1_ref[...]
    h = jnp.maximum(h, 0.0)

    # layer2: Linear(H -> O), no ReLU (MXU)
    logits = jnp.dot(h, w2_ref[...], preferred_element_type=jnp.float32) + b2_ref[...]

    # softmax over last dim (matches F.softmax on a 2-D tensor, dim=1)
    m = jnp.max(logits, axis=-1, keepdims=True)
    e = jnp.exp(logits - m)
    denom = jnp.sum(e, axis=-1, keepdims=True)
    # exact reciprocal (approx=False) to keep row sums within 1e-5 of 1.0
    o_ref[...] = e * pl.reciprocal(denom, approx=False)


def prepare_params(params):
    """One-time conversion of PyTorch-layout params (W=(out,in), b=(out,)) to
    kernel layout: Wt=(in,out) f32, b=(1,out) f32. Do this at init, not per call."""
    return [
        (jnp.asarray(w, jnp.float32).T, jnp.asarray(b, jnp.float32).reshape(1, -1))
        for (w, b) in params
    ]


def mlp_forward(x, prepared_params):
    """x: (batch, 1) f32. prepared_params: output of prepare_params()."""
    (w0t, b0), (w1t, b1), (w2t, b2) = prepared_params
    x = jnp.asarray(x, jnp.float32)
    batch, in_dim = x.shape
    num_out = w2t.shape[1]

    # Batch tile: multiple of 8 (f32 sublane) when possible; weights (~5 KB)
    # stay fully resident so the tile can be large to amortize step overhead.
    if batch % 8 == 0:
        tb = min(batch, 512)
    else:
        tb = batch  # full-extent block is always layout-legal
    grid = (pl.cdiv(batch, tb),)

    def resident_spec(arr):
        # full-array block, pinned at (0, 0) for every grid step
        nd = arr.ndim
        return pl.BlockSpec(arr.shape, lambda i, _nd=nd: (0,) * _nd,
                            memory_space=pltpu.VMEM)

    in_specs = [
        pl.BlockSpec((tb, in_dim), lambda i: (i, 0), memory_space=pltpu.VMEM),
        resident_spec(w0t), resident_spec(b0),
        resident_spec(w1t), resident_spec(b1),
        resident_spec(w2t), resident_spec(b2),
    ]
    out_specs = pl.BlockSpec((tb, num_out), lambda i: (i, 0),
                             memory_space=pltpu.VMEM)

    return pl.pallas_call(
        mlp_softmax_kernel,
        out_shape=jax.ShapeDtypeStruct((batch, num_out), jnp.float32),
        grid=grid,
        in_specs=in_specs,
        out_specs=out_specs,
        compiler_params=pltpu.CompilerParams(
            dimension_semantics=("parallel",)),
    )(x, w0t, b0, w1t, b1, w2t, b2)


def init_params(key, num_layers, num_hidden, num_out):
    """Deterministic init mirroring the module: xavier_uniform weights, zero biases.
    Returned in PyTorch layout: W=(out,in), b=(out,)."""
    dims = [1] + [num_hidden] * (num_layers - 1) + [num_out]
    params = []
    for i in range(num_layers):
        fan_in, fan_out = dims[i], dims[i + 1]
        key, sub = jax.random.split(key)
        bound = (6.0 / (fan_in + fan_out)) ** 0.5
        w = jax.random.uniform(
            sub, (fan_out, fan_in), minval=-bound, maxval=bound, dtype=jnp.float32
        )
        b = jnp.zeros((fan_out,), dtype=jnp.float32)
        params.append((w, b))
    return params


def mlp_forward_ref(x, params):
    """Pure-JAX reference (PyTorch-layout params) for correctness checking."""
    h = jnp.asarray(x, jnp.float32)
    n = len(params)
    for i, (w, b) in enumerate(params):
        h = h @ w.T + b
        if i != n - 1:
            h = jnp.maximum(h, 0.0)
    return jax.nn.softmax(h, axis=-1)


if __name__ == "__main__":
    num_layers, num_hidden, num_out = 3, 32, 8
    batch = 8

    key = jax.random.PRNGKey(0)
    key, xkey = jax.random.split(key)
    params = init_params(key, num_layers, num_hidden, num_out)
    prepared = prepare_params(params)  # hoisted out of the forward call

    # layout: input is (batch, 1) like the PyTorch module (layer0 has in_features=1)
    x = jax.random.normal(xkey, (batch, 1), dtype=jnp.float32)

    out = mlp_forward(x, prepared)
    out = jax.block_until_ready(out)

    # correctness checks
    assert out.shape == (batch, num_out)
    assert jnp.allclose(jnp.sum(out, axis=-1), 1.0, atol=1e-5)
    ref = mlp_forward_ref(x, params)
    assert jnp.allclose(out, ref, atol=1e-5, rtol=1e-5)

    print("KERNEL_OK")
</pallas_src>

<mosaic_0001>
module attributes {stable_mosaic.version = 11 : i64} {
  func.func @mlp_softmax_kernel(%arg0: i32, %arg1: memref<8x1xf32, #tpu.memory_space<vmem>>, %arg2: memref<1x32xf32, #tpu.memory_space<vmem>>, %arg3: memref<1x32xf32, #tpu.memory_space<vmem>>, %arg4: memref<32x32xf32, #tpu.memory_space<vmem>>, %arg5: memref<1x32xf32, #tpu.memory_space<vmem>>, %arg6: memref<32x8xf32, #tpu.memory_space<vmem>>, %arg7: memref<1x8xf32, #tpu.memory_space<vmem>>, %arg8: memref<8x8xf32, #tpu.memory_space<vmem>>) attributes {dimension_semantics = [#tpu.dimension_semantics<parallel>], iteration_bounds = array<i64: 1>, scalar_prefetch = 0 : i64, scratch_operands = 0 : i64, tpu.core_type = #tpu.core_type<tc>, window_params = [{transform_indices = @transform_0, window_bounds = array<i64: 8, 1>}, {pipeline_mode = #tpu.pipeline_mode<synchronous>, transform_indices = @transform_1, window_bounds = array<i64: 1, 32>}, {pipeline_mode = #tpu.pipeline_mode<synchronous>, transform_indices = @transform_2, window_bounds = array<i64: 1, 32>}, {pipeline_mode = #tpu.pipeline_mode<synchronous>, transform_indices = @transform_3, window_bounds = array<i64: 32, 32>}, {pipeline_mode = #tpu.pipeline_mode<synchronous>, transform_indices = @transform_4, window_bounds = array<i64: 1, 32>}, {pipeline_mode = #tpu.pipeline_mode<synchronous>, transform_indices = @transform_5, window_bounds = array<i64: 32, 8>}, {pipeline_mode = #tpu.pipeline_mode<synchronous>, transform_indices = @transform_6, window_bounds = array<i64: 1, 8>}, {transform_indices = @transform_7, window_bounds = array<i64: 8, 8>}]} {
    %c0 = arith.constant 0 : index
    %c0_0 = arith.constant 0 : index
    %0 = vector.load %arg1[%c0, %c0_0] : memref<8x1xf32, #tpu.memory_space<vmem>>, vector<8x1xf32>
    %c0_1 = arith.constant 0 : index
    %c0_2 = arith.constant 0 : index
    %1 = vector.load %arg2[%c0_1, %c0_2] : memref<1x32xf32, #tpu.memory_space<vmem>>, vector<1x32xf32>
    %2 = vector.broadcast %0 : vector<8x1xf32> to vector<8x32xf32>
    %3 = vector.broadcast %1 : vector<1x32xf32> to vector<8x32xf32>
    %4 = arith.mulf %2, %3 : vector<8x32xf32>
    %c0_3 = arith.constant 0 : index
    %c0_4 = arith.constant 0 : index
    %5 = vector.load %arg3[%c0_3, %c0_4] : memref<1x32xf32, #tpu.memory_space<vmem>>, vector<1x32xf32>
    %6 = vector.broadcast %5 : vector<1x32xf32> to vector<8x32xf32>
    %7 = arith.addf %4, %6 : vector<8x32xf32>
    %cst = arith.constant 0.000000e+00 : f32
    %8 = vector.broadcast %cst : f32 to vector<8x32xf32>
    %9 = arith.maximumf %7, %8 : vector<8x32xf32>
    %c0_5 = arith.constant 0 : index
    %c0_6 = arith.constant 0 : index
    %10 = vector.load %arg4[%c0_5, %c0_6] : memref<32x32xf32, #tpu.memory_space<vmem>>, vector<32x32xf32>
    %cst_7 = arith.constant dense<0.000000e+00> : vector<8x32xf32>
    %11 = tpu.matmul %9, %10, %cst_7 {dimension_numbers = #tpu.dot_dimension_numbers<[1], [0], [0], [1], [0, 0, 1, 1], [], []>} : vector<8x32xf32>, vector<32x32xf32>, vector<8x32xf32> -> vector<8x32xf32>
    %c0_8 = arith.constant 0 : index
    %c0_9 = arith.constant 0 : index
    %12 = vector.load %arg5[%c0_8, %c0_9] : memref<1x32xf32, #tpu.memory_space<vmem>>, vector<1x32xf32>
    %13 = vector.broadcast %12 : vector<1x32xf32> to vector<8x32xf32>
    %14 = arith.addf %11, %13 : vector<8x32xf32>
    %cst_10 = arith.constant 0.000000e+00 : f32
    %15 = vector.broadcast %cst_10 : f32 to vector<8x32xf32>
    %16 = arith.maximumf %14, %15 : vector<8x32xf32>
    %c0_11 = arith.constant 0 : index
    %c0_12 = arith.constant 0 : index
    %17 = vector.load %arg6[%c0_11, %c0_12] : memref<32x8xf32, #tpu.memory_space<vmem>>, vector<32x8xf32>
    %cst_13 = arith.constant dense<0.000000e+00> : vector<8x8xf32>
    %18 = tpu.matmul %16, %17, %cst_13 {dimension_numbers = #tpu.dot_dimension_numbers<[1], [0], [0], [1], [0, 0, 1, 1], [], []>} : vector<8x32xf32>, vector<32x8xf32>, vector<8x8xf32> -> vector<8x8xf32>
    %c0_14 = arith.constant 0 : index
    %c0_15 = arith.constant 0 : index
    %19 = vector.load %arg7[%c0_14, %c0_15] : memref<1x8xf32, #tpu.memory_space<vmem>>, vector<1x8xf32>
    %20 = vector.broadcast %19 : vector<1x8xf32> to vector<8x8xf32>
    %21 = arith.addf %18, %20 : vector<8x8xf32>
    %cst_16 = arith.constant dense<0xFF800000> : vector<8xf32>
    %22 = vector.multi_reduction <maximumf>, %21, %cst_16 [1] : vector<8x8xf32> to vector<8xf32>
    %23 = vector.shape_cast %22 : vector<8xf32> to vector<8x1xf32>
    %24 = vector.broadcast %23 : vector<8x1xf32> to vector<8x8xf32>
    %25 = arith.subf %21, %24 : vector<8x8xf32>
    %26 = math.exp %25 : vector<8x8xf32>
    %cst_17 = arith.constant dense<0.000000e+00> : vector<8xf32>
    %27 = vector.multi_reduction <add>, %26, %cst_17 [1] : vector<8x8xf32> to vector<8xf32>
    %28 = vector.shape_cast %27 : vector<8xf32> to vector<8x1xf32>
    %29 = tpu.reciprocal %28 : vector<8x1xf32> -> vector<8x1xf32>
    %30 = vector.broadcast %29 : vector<8x1xf32> to vector<8x8xf32>
    %31 = arith.mulf %26, %30 : vector<8x8xf32>
    %c0_18 = arith.constant 0 : index
    %c0_19 = arith.constant 0 : index
    %32 = vector.load %arg8[%c0_18, %c0_19] : memref<8x8xf32, #tpu.memory_space<vmem>>, vector<8x8xf32>
    tpu.vector_store %arg8[%c0_18, %c0_19], %31 {strides = array<i32>} : memref<8x8xf32, #tpu.memory_space<vmem>>, vector<8x8xf32>,
    return
  }
  func.func @transform_0(%arg0: i32) -> (i32, i32) {
    %c0_i32 = arith.constant 0 : i32
    %c0_i32_0 = arith.constant 0 : i32
    return %arg0, %c0_i32 : i32, i32
  }
  func.func @transform_1(%arg0: i32) -> (i32, i32) {
    %c0_i32 = arith.constant 0 : i32
    %c0_i32_0 = arith.constant 0 : i32
    %c0_i32_1 = arith.constant 0 : i32
    return %c0_i32, %c0_i32_0 : i32, i32
  }
  func.func @transform_2(%arg0: i32) -> (i32, i32) {
    %c0_i32 = arith.constant 0 : i32
    %c0_i32_0 = arith.constant 0 : i32
    %c0_i32_1 = arith.constant 0 : i32
    return %c0_i32, %c0_i32_0 : i32, i32
  }
  func.func @transform_3(%arg0: i32) -> (i32, i32) {
    %c0_i32 = arith.constant 0 : i32
    %c0_i32_0 = arith.constant 0 : i32
    %c0_i32_1 = arith.constant 0 : i32
    return %c0_i32, %c0_i32_0 : i32, i32
  }
  func.func @transform_4(%arg0: i32) -> (i32, i32) {
    %c0_i32 = arith.constant 0 : i32
    %c0_i32_0 = arith.constant 0 : i32
    %c0_i32_1 = arith.constant 0 : i32
    return %c0_i32, %c0_i32_0 : i32, i32
  }
  func.func @transform_5(%arg0: i32) -> (i32, i32) {
    %c0_i32 = arith.constant 0 : i32
    %c0_i32_0 = arith.constant 0 : i32
    %c0_i32_1 = arith.constant 0 : i32
    return %c0_i32, %c0_i32_0 : i32, i32
  }
  func.func @transform_6(%arg0: i32) -> (i32, i32) {
    %c0_i32 = arith.constant 0 : i32
    %c0_i32_0 = arith.constant 0 : i32
    %c0_i32_1 = arith.constant 0 : i32
    return %c0_i32, %c0_i32_0 : i32, i32
  }
  func.func @transform_7(%arg0: i32) -> (i32, i32) {
    %c0_i32 = arith.constant 0 : i32
    %c0_i32_0 = arith.constant 0 : i32
    return %arg0, %c0_i32 : i32, i32
  }
}

</mosaic_0001>

<llo_original>
// kernel: tpu_custom_call.1
$region0: #{tpu_custom_call.1}
  #allocation0 [shape = 'u32[]', space=smem, size = 0x4, offset = 0x4, fixed_abs, tag = 'smem constant byte address 0x4 - core index']
  #allocation1 [shape = 'u32[72,128]{1,0:T(1,128)}', space=vmem, size = 0x9000, scoped, tag = 'internal scratch']
  %s0 = inlined_call_operand.vmem [shape: f32[8,1], index: 0, kind: input, shape index: {}]
  %s1 = inlined_call_operand.vmem [shape: f32[1,32], index: 1, kind: input, shape index: {}]
  %s2 = inlined_call_operand.vmem [shape: f32[1,32], index: 2, kind: input, shape index: {}]
  %s3 = inlined_call_operand.vmem [shape: f32[32,32], index: 3, kind: input, shape index: {}]
  %s4 = inlined_call_operand.vmem [shape: f32[1,32], index: 4, kind: input, shape index: {}]
  %s5 = inlined_call_operand.vmem [shape: f32[32,8], index: 5, kind: input, shape index: {}]
  %s6 = inlined_call_operand.vmem [shape: f32[1,8], index: 6, kind: input, shape index: {}]
  %s7 = inlined_call_operand.hbm [shape: f32[8,8], index: 7, kind: output, shape index: {}]
  %s8 = sld [smem:[#allocation0]]
  $region38: #{tpu_custom_call.1} parent=0
    _
  %s10 = ssub.s32 1, %s8
  %s11 = scalar_select 0, %s10, %s8
  $region1: #{tpu_custom_call.1} parent=0
    #allocation2 [shape = 'u8[4096]{0}', space=vmem, size = 0x1000, scoped, tag = 'output window, operand 0, single buffered']
    #allocation3 [shape = 's32[1]{0}', space=sflag, size = 0x4, scoped, tag = 'scoped memory for tpu_custom_call.1']
    %12 = vsyncpa [#allocation3], 0
    // Predicated region
    $region2: #{tpu_custom_call.1} parent=1 // pred_check
      _
    $region3: #{tpu_custom_call.1} parent=1 // pred_check_branch
      %14 = sbr.rel (0) target = $region5
    $region4: #{tpu_custom_call.1} parent=1 // pred_region
      _
    $region5: #{tpu_custom_call.1} parent=1 // pred_fallthru
      _
    // Predicated region
    $region6: #{tpu_custom_call.1} parent=1 // pred_check
      _
    $region7: #{tpu_custom_call.1} parent=1 // pred_check_branch
      %16 = sbr.rel (0) target = $region9
    $region8: #{tpu_custom_call.1} parent=1 // pred_region
      _
    $region9: #{tpu_custom_call.1} parent=1 // pred_fallthru
      _
    // Predicated region
    $region10: #{tpu_custom_call.1} parent=1 // pred_check
      _
    $region11: #{tpu_custom_call.1} parent=1 // pred_check_branch
      %18 = sbr.rel (0) target = $region13
    $region12: #{tpu_custom_call.1} parent=1 // pred_region
      _
    $region13: #{tpu_custom_call.1} parent=1 // pred_fallthru
      _
    // Predicated region
    $region14: #{tpu_custom_call.1} parent=1 // pred_check
      _
    $region15: #{tpu_custom_call.1} parent=1 // pred_check_branch
      %20 = sbr.rel (0) target = $region17
    $region16: #{tpu_custom_call.1} parent=1 // pred_region
      _
    $region17: #{tpu_custom_call.1} parent=1 // pred_fallthru
      _
    // Predicated region
    $region18: #{tpu_custom_call.1} parent=1 // pred_check
      _
    $region19: #{tpu_custom_call.1} parent=1 // pred_check_branch
      %22 = sbr.rel (0) target = $region21
    $region20: #{tpu_custom_call.1} parent=1 // pred_region
      _
    $region21: #{tpu_custom_call.1} parent=1 // pred_fallthru
      _
    // Predicated region
    $region22: #{tpu_custom_call.1} parent=1 // pred_check
      _
    $region23: #{tpu_custom_call.1} parent=1 // pred_check_branch
      %24 = sbr.rel (0) target = $region25
    $region24: #{tpu_custom_call.1} parent=1 // pred_region
      _
    $region25: #{tpu_custom_call.1} parent=1 // pred_fallthru
      _
    // Predicated region
    $region26: #{tpu_custom_call.1} parent=1 // pred_check
      _
    $region27: #{tpu_custom_call.1} parent=1 // pred_check_branch
      %26 = sbr.rel (0) target = $region29
    $region28: #{tpu_custom_call.1} parent=1 // pred_region
      _
    $region29: #{tpu_custom_call.1} parent=1 // pred_fallthru
      _
    %v27 = vld [vmem:[%s0] sm:$0xff]
    %v28 = vld [vmem:[%s1] sm:$0x1]
    %30 = vset.pattern.permute.xlu0 0
    %31 = vperm.xlu0 %30, %v27
    %v32 = vpop.permute.xlu0 %31
    %v35 = vperm.slane %v28, 0
    %v37 = vmul.f32 %v32, %v35
    %v38 = vld [vmem:[%s2] sm:$0x1]
    %v40 = vperm.slane %v38, 0
    %v42 = vadd.f32 %v37, %v40
    %v43 = vmax.f32 %v42, 0.0
    %v44 = vld [vmem:[%s3] sm:$0xff]
    %v45 = vld [vmem:[%s3 + $0x8] sm:$0xff]
    %v46 = vld [vmem:[%s3 + $0x10] sm:$0xff]
    %v47 = vld [vmem:[%s3 + $0x18] sm:$0xff]
    %v48 = vld [vmem:[%s4] sm:$0x1]
    %v50 = vperm.slane %v48, 0
    %vm52 = vcmask 261120
    %v54 = vsel %vm52, %v43, 0
    %56 = vmatpush.msra.mxu0 0.0
    %57 = vmatpush.msra.mxu0 0.0
    %58 = vmatpush.msra.mxu0 0.0
    %59 = vmatpush.msra.mxu0 0.0
    %60 = vmatpush.msra.mxu0 0.0
    %61 = vmatpush.msra.mxu0 0.0
    %62 = vmatpush.msra.mxu0 0.0
    %63 = vmatpush.msra.mxu0 0.0
    %64 = vmatpush.msra.mxu0 0.0
    %65 = vmatpush.msra.mxu0 0.0
    %66 = vmatpush.msra.mxu0 0.0
    %67 = vmatpush.msra.mxu0 0.0
    %68 = vmatpush.msra.mxu0 %v47
    %69 = vmatpush.msra.mxu0 %v46
    %70 = vmatpush.msra.mxu0 %v45
    %71 = vmatpush.msra.mxu0 %v44
    %72 = vmatmul.f32.gmra.mxu0 %v54
    %v73 = vpop.f32.mrf.mxu0
    %v74 = vadd.f32 %v50, %v73
    %75 = vdwg.mxu0
    %v76 = vmax.f32 %v74, 0.0
    %v77 = vld [vmem:[%s5] sm:$0xff]
    %v78 = vld [vmem:[%s5 + $0x8] sm:$0xff]
    %v79 = vld [vmem:[%s5 + $0x10] sm:$0xff]
    %v80 = vld [vmem:[%s5 + $0x18] sm:$0xff]
    %v81 = vld [vmem:[%s6] sm:$0x1]
    %v83 = vperm.slane %v81, 0
    %v86 = vsel %vm52, %v76, 0
    %88 = vmatpush.msra.mxu0 0.0
    %89 = vmatpush.msra.mxu0 0.0
    %90 = vmatpush.msra.mxu0 0.0
    %91 = vmatpush.msra.mxu0 0.0
    %92 = vmatpush.msra.mxu0 0.0
    %93 = vmatpush.msra.mxu0 0.0
    %94 = vmatpush.msra.mxu0 0.0
    %95 = vmatpush.msra.mxu0 0.0
    %96 = vmatpush.msra.mxu0 0.0
    %97 = vmatpush.msra.mxu0 0.0
    %98 = vmatpush.msra.mxu0 0.0
    %99 = vmatpush.msra.mxu0 0.0
    %100 = vmatpush.msra.mxu0 %v80
    %101 = vmatpush.msra.mxu0 %v79
    %102 = vmatpush.msra.mxu0 %v78
    %103 = vmatpush.msra.mxu0 %v77
    %104 = vmatmul.f32.gmra.mxu0 %v86
    %v105 = vpop.f32.mrf.mxu0
    %v106 = vadd.f32 %v83, %v105
    %107 = vdwg.mxu0
    %vm108 = vcmask 64512
    %v109 = vsel %vm108, %v106, -inf
    %110 = vmax.xlane.f32.xlu0 %v109
    %v111 = vpop.xlane.xlu0 %110
    %v112 = vsub.f32 %v106, %v111
    %v113 = vmul.f32 %v112, 1.442695
    %v114 = vpow.pop %v113
    %v115 = vsel %vm108, %v114, 0.0
    %116 = vadd.xlane.f32.xlu0 %v115
    %v117 = vpop.xlane.xlu0 %116
    %v118 = vrcp.pop %v117
    %v119 = vmul.f32 %v117, %v118
    %v120 = vsub.f32 1.0, %v119
    %v121 = vmul.f32 %v118, %v120
    %v122 = vadd.f32 %v118, %v121
    %vm123 = vweird.f32 %v117
    %vm124 = vweird.f32 %v118
    %vm125 = vmor %vm123, %vm124
    %v126 = vsel %vm125, %v118, %v122
    %v127 = vand.u32 2147483647, %v117
    %vm128 = vcmp.eq.f32.partialorder %v127, 8.507059e+37
    %v129 = vand.u32 %v117, 2147483648
    %v130 = vor.u32 1.1754944e-38, %v129
    %v131 = vsel %vm128, %v130, %v126
    %v132 = vmul.f32 %v114, %v131
    %133 = vst.msk [vmem:[#allocation2] sm:$0xff] %vm108, %v132
    // Predicated region
    $region30: #{tpu_custom_call.1} parent=1 // pred_check
      _
    $region31: #{tpu_custom_call.1} parent=1 // pred_check_branch
      %135 = sbr.rel (0) target = $region33
    $region32: #{tpu_custom_call.1} parent=1 // pred_region
      %137 = vsyncadd [#allocation3], 0
      %s139 = sshll.u32 [#allocation2], 4
      %s140 = int_to_ptr.vmem [resolvable:$true] %s139
      %s141 = sshll.u32 %s7, 4
      %s142 = int_to_ptr.hbm [resolvable:$true] %s141
      %144 = dma.vmem_to_hbm [thread:$0]  %s140, 128, %s142, [#allocation3]
    $region33: #{tpu_custom_call.1} parent=1 // pred_fallthru
      _
    // Predicated region
    $region34: #{tpu_custom_call.1} parent=1 // pred_check
      _
    $region35: #{tpu_custom_call.1} parent=1 // pred_check_branch
      %146 = sbr.rel (0) target = $region37
    $region36: #{tpu_custom_call.1} parent=1 // pred_region
      %148 = dma.done [#allocation3], 128
    $region37: #{tpu_custom_call.1} parent=1 // pred_fallthru
      _
    %149 = vsyncpa [#allocation3], 1

</llo_original>
